<compile_context>
chip_gen: v7x
topology: tpu7x:2x2x1
jax: 0.10.0
libtpu: 0.0.40
codegen_flags: <defaults>
</compile_context>

<pallas_src>
import jax
import jax.numpy as jnp
from jax.experimental import pallas as pl
from jax.experimental.pallas import tpu as pltpu


def _normalize01_kernel(x_ref, o_ref):
    # x_ref / o_ref: (bt, C, TILE_S) tile.  C (axis=1) is the reduction axis
    # (sublane / cross-vreg path), TILE_S is lane-dense (multiple of 128).
    x = x_ref[...]
    if x.dtype != jnp.float32:
        x = x.astype(jnp.float32)
    c = x.shape[1]
    mean = jnp.mean(x, axis=1, keepdims=True)                    # (bt, 1, TILE_S)
    diff = x - mean
    # torch.std uses Bessel's correction (unbiased, divide by C-1).
    var = jnp.sum(diff * diff, axis=1, keepdims=True) * jnp.float32(1.0 / (c - 1))
    inv_std = jax.lax.rsqrt(var)                                 # EUP rsqrt + VPU mul
    o_ref[...] = (diff * inv_std).astype(o_ref.dtype)


def normalize01(x, *, tile_s=2048, target_block_bytes=4 << 20,
                vmem_limit_bytes=48 << 20):
    """x: (B, C, H, W). Returns (x - mean_c) / std_c with unbiased std over C (dim=1)."""
    B, C, H, W = x.shape
    assert C >= 2, "unbiased std over dim=1 requires C >= 2 (C-1 divisor)"
    assert tile_s % 128 == 0

    S = H * W
    xs = x.reshape(B, C, S)                                  # contiguous, free
    itemsize = jnp.dtype(x.dtype).itemsize

    # Lane-dense spatial tile: a multiple of 128, no larger than the
    # 128-rounded spatial extent.  No padding of the array itself — the last
    # (ragged) block is masked by Pallas on write.
    s_lane = pl.cdiv(S, 128) * 128
    tile = min(tile_s, s_lane)
    n_s = pl.cdiv(S, tile)

    # Batch blocking so each grid step moves a multi-MiB block (amortizes the
    # ~0.35 us per-step overhead).  4 bufs (in/out double-buffered) + ~2 f32
    # temporaries of one block stay comfortably under the 48 MiB scoped VMEM.
    row_bytes = C * tile * itemsize
    bt = int(max(1, min(B, target_block_bytes // max(1, row_bytes))))
    # Keep >= 2 parallel grid steps when possible (v7x has 2 TensorCores).
    if n_s == 1 and B >= 2:
        bt = min(bt, -(-B // 2))
    n_b = pl.cdiv(B, bt)

    out = pl.pallas_call(
        _normalize01_kernel,
        out_shape=jax.ShapeDtypeStruct((B, C, S), x.dtype),
        grid=(n_b, n_s),
        in_specs=[pl.BlockSpec((bt, C, tile), lambda b, s: (b, 0, s))],
        out_specs=pl.BlockSpec((bt, C, tile), lambda b, s: (b, 0, s)),
        compiler_params=pltpu.CompilerParams(
            dimension_semantics=("parallel", "parallel"),
            vmem_limit_bytes=vmem_limit_bytes,
        ),
    )(xs)

    return out.reshape(B, C, H, W)


def _reference(x):
    mean = jnp.mean(x, axis=1, keepdims=True)
    var = jnp.sum((x - mean) ** 2, axis=1, keepdims=True) / (x.shape[1] - 1)
    return (x - mean) / jnp.sqrt(var)


if __name__ == "__main__":
    key = jax.random.PRNGKey(0)
    x = jax.random.normal(key, (2, 4, 16, 16), dtype=jnp.float32)

    out = normalize01(x)
    jax.block_until_ready(out)

    ref = _reference(x)
    assert out.shape == x.shape and out.dtype == x.dtype
    assert jnp.allclose(out, ref, atol=1e-5, rtol=1e-5)

    print("KERNEL_OK")
</pallas_src>

<mosaic_0001>
module attributes {stable_mosaic.version = 11 : i64} {
  func.func @_normalize01_kernel(%arg0: i32, %arg1: i32, %arg2: memref<1x4x256xf32, #tpu.memory_space<vmem>>, %arg3: memref<1x4x256xf32, #tpu.memory_space<vmem>>) attributes {dimension_semantics = [#tpu.dimension_semantics<parallel>, #tpu.dimension_semantics<parallel>], iteration_bounds = array<i64: 2, 1>, scalar_prefetch = 0 : i64, scratch_operands = 0 : i64, tpu.core_type = #tpu.core_type<tc>, window_params = [{transform_indices = @transform_0, window_bounds = array<i64: 1, 4, 256>}, {transform_indices = @transform_1, window_bounds = array<i64: 1, 4, 256>}]} {
    %c0 = arith.constant 0 : index
    %c0_0 = arith.constant 0 : index
    %c0_1 = arith.constant 0 : index
    %0 = vector.load %arg2[%c0, %c0_0, %c0_1] : memref<1x4x256xf32, #tpu.memory_space<vmem>>, vector<1x4x256xf32>
    %cst = arith.constant dense<0.000000e+00> : vector<1x256xf32>
    %1 = vector.multi_reduction <add>, %0, %cst [1] : vector<1x4x256xf32> to vector<1x256xf32>
    %2 = vector.shape_cast %1 : vector<1x256xf32> to vector<1x1x256xf32>
    %cst_2 = arith.constant 4.000000e+00 : f32
    %3 = vector.broadcast %cst_2 : f32 to vector<1x1x256xf32>
    %4 = arith.divf %2, %3 : vector<1x1x256xf32>
    %5 = vector.broadcast %4 : vector<1x1x256xf32> to vector<1x4x256xf32>
    %6 = arith.subf %0, %5 : vector<1x4x256xf32>
    %7 = arith.mulf %6, %6 : vector<1x4x256xf32>
    %cst_3 = arith.constant dense<0.000000e+00> : vector<1x256xf32>
    %8 = vector.multi_reduction <add>, %7, %cst_3 [1] : vector<1x4x256xf32> to vector<1x256xf32>
    %9 = vector.shape_cast %8 : vector<1x256xf32> to vector<1x1x256xf32>
    %cst_4 = arith.constant 0.333333343 : f32
    %10 = vector.broadcast %cst_4 : f32 to vector<1x1x256xf32>
    %11 = arith.mulf %9, %10 : vector<1x1x256xf32>
    %12 = math.rsqrt %11 : vector<1x1x256xf32>
    %13 = vector.broadcast %12 : vector<1x1x256xf32> to vector<1x4x256xf32>
    %14 = arith.mulf %6, %13 : vector<1x4x256xf32>
    %c0_5 = arith.constant 0 : index
    %c0_6 = arith.constant 0 : index
    %c0_7 = arith.constant 0 : index
    %15 = vector.load %arg3[%c0_5, %c0_6, %c0_7] : memref<1x4x256xf32, #tpu.memory_space<vmem>>, vector<1x4x256xf32>
    tpu.vector_store %arg3[%c0_5, %c0_6, %c0_7], %14 {strides = array<i32>} : memref<1x4x256xf32, #tpu.memory_space<vmem>>, vector<1x4x256xf32>,
    return
  }
  func.func @transform_0(%arg0: i32, %arg1: i32) -> (i32, i32, i32) {
    %c0_i32 = arith.constant 0 : i32
    %c0_i32_0 = arith.constant 0 : i32
    return %arg0, %c0_i32, %arg1 : i32, i32, i32
  }
  func.func @transform_1(%arg0: i32, %arg1: i32) -> (i32, i32, i32) {
    %c0_i32 = arith.constant 0 : i32
    %c0_i32_0 = arith.constant 0 : i32
    return %arg0, %c0_i32, %arg1 : i32, i32, i32
  }
}

</mosaic_0001>

<llo_original>
// kernel: tpu_custom_call.1
$region0: #{tpu_custom_call.1}
  #allocation0 [shape = 'u32[]', space=smem, size = 0x4, offset = 0x4, fixed_abs, tag = 'smem constant byte address 0x4 - core index']
  #allocation1 [shape = 'u32[144,128]{1,0:T(1,128)}', space=vmem, size = 0x12000, scoped, tag = 'internal scratch']
  %s0 = inlined_call_operand.hbm [shape: f32[2,4,256], index: 0, kind: input, shape index: {}]
  %s1 = inlined_call_operand.hbm [shape: f32[2,4,256], index: 1, kind: output, shape index: {}]
  %s2 = sld [smem:[#allocation0]]
  $region41: #{tpu_custom_call.1} parent=0
    _
  %s4 = ssub.s32 1, %s2
  %s5 = scalar_select 0, %s4, %s2
  $region1: #{tpu_custom_call.1} parent=0
    #allocation2 [shape = 'u8[8192]{0}', space=vmem, size = 0x2000, scoped, tag = 'input window, operand 0']
    #allocation3 [shape = 's32[2]{0}', space=sflag, size = 0x8, scoped, tag = 'scoped memory for tpu_custom_call.1']
    #allocation4 [shape = 's32[2]{0}', space=sflag, size = 0x8, scoped, tag = 'scoped memory for tpu_custom_call.1']
    #allocation5 [shape = 'u8[8192]{0}', space=vmem, size = 0x2000, scoped, tag = 'output window, operand 0']
    %6 = vsyncpa [#allocation3], 0
    %s7 = scalar_lea.sflag [#allocation3], 1
    %8 = vsyncpa %s7, 0
    %9 = vsyncpa [#allocation4], 0
    %s10 = scalar_lea.sflag [#allocation4], 1
    %11 = vsyncpa %s10, 0
    loop: start=0, step=1, limit=4
    $region2: #{tpu_custom_call.1} parent=1 // loop_pre_header
      _
    $region3: #{tpu_custom_call.1} parent=1 // loop_header
      %s13 = sphi 0, %s17
      %p14 = scmp.ge.s32.totalorder %s13, 4
      %s20 = sphi 0, %s32
      %s21 = sphi 0, %s28
      %s22 = sphi 0, %s20
      %s23 = sphi 0, %s21
      %s24 = sphi 0, %s22
      %s25 = sphi 0, %s23
      %s37 = sphi 0, %s39
      %s40 = sphi 0, %s37
      %s41 = sphi 0, %s40
      %s57 = sphi 0, %s41
      %s65 = sphi 0, %s67
      %s68 = sphi 0, %s65
      %s69 = sphi 0, %s68
      %s85 = sphi 0, %s69
    $region4: #{tpu_custom_call.1} parent=1 // loop_header_branch
      %16 = sbr.rel (%p14) target = $region8
    $region5: #{tpu_custom_call.1} parent=1 // loop_body
      %s18 = ssub.s32 %s13, 1
      %s19 = ssub.s32 %s13, 2
      %s26 = sadd.s32 1, %s21
      %p27 = scmp.ge.s32.totalorder %s26, 1
      %s28 = scalar_select %p27, 0, %s26
      %s29 = sadd.s32 1, %s20
      %s30 = scalar_select %p27, %s29, %s20
      %p31 = scmp.ge.s32.totalorder %s30, 2
      %s32 = scalar_select %p31, 0, %s30
      %s33 = ssub.s32 %s20, %s32
      %s34 = ssub.s32 %s21, %s28
      %s35 = sor.u32 %s33, %s34
      %p36 = scmp.eq.s32.totalorder %s35, 0
      %s38 = sadd.s32 %s37, 1
      %s39 = scalar_select %p36, %s37, %s38
      %p42 = pneg %p36
      %p43 = scmp.eq.s32.totalorder %s13, 1
      %p44 = por %p42, %p43
      %p45 = scmp.ne.s32.totalorder %s37, %s40
      %p46 = scmp.eq.s32.totalorder %s13, 0
      %p47 = por %p45, %p46
      %p48 = scmp.ne.s32.totalorder %s37, %s40
      %p49 = scmp.eq.s32.totalorder %s18, 1
      %p50 = por %p48, %p49
      %p51 = scmp.ne.s32.totalorder %s40, %s41
      %p52 = scmp.eq.s32.totalorder %s18, 0
      %p53 = por %p51, %p52
      %p54 = scmp.ne.s32.totalorder %s40, %s41
      %p55 = scmp.eq.s32.totalorder %s19, 1
      %p56 = por %p54, %p55
      %p58 = scmp.ne.s32.totalorder %s41, %s57
      %p59 = scmp.eq.s32.totalorder %s19, 0
      %p60 = por %p58, %p59
      %s61 = ssub.s32 %s20, %s32
      %s62 = ssub.s32 %s21, %s28
      %s63 = sor.u32 %s61, %s62
      %p64 = scmp.eq.s32.totalorder %s63, 0
      %s66 = sadd.s32 %s65, 1
      %s67 = scalar_select %p64, %s65, %s66
      %p70 = pneg %p64
      %p71 = scmp.eq.s32.totalorder %s13, 1
      %p72 = por %p70, %p71
      %p73 = scmp.ne.s32.totalorder %s65, %s68
      %p74 = scmp.eq.s32.totalorder %s13, 0
      %p75 = por %p73, %p74
      %p76 = scmp.ne.s32.totalorder %s65, %s68
      %p77 = scmp.eq.s32.totalorder %s18, 1
      %p78 = por %p76, %p77
      %p79 = scmp.ne.s32.totalorder %s68, %s69
      %p80 = scmp.eq.s32.totalorder %s18, 0
      %p81 = por %p79, %p80
      %p82 = scmp.ne.s32.totalorder %s68, %s69
      %p83 = scmp.eq.s32.totalorder %s19, 1
      %p84 = por %p82, %p83
      %p86 = scmp.ne.s32.totalorder %s69, %s85
      %p87 = scmp.eq.s32.totalorder %s19, 0
      %p88 = por %p86, %p87
      %p89 = scmp.le.s32.totalorder 1, %s13
      %p90 = scmp.lt.s32.totalorder %s13, 3
      %p91 = pnand %p89, %p90
      %p92 = pneg %p91
      // Predicated region
      $region9: #{tpu_custom_call.1} parent=5 // pred_check
        _
      $region10: #{tpu_custom_call.1} parent=5 // pred_check_branch
        %94 = sbr.rel (%p91) target = $region12
      $region11: #{tpu_custom_call.1} parent=5 // pred_region
        %s95 = ssub.s32 %s13, 1
      $region12: #{tpu_custom_call.1} parent=5 // pred_fallthru
        _
      %p96 = scmp.lt.s32.totalorder %s13, 2
      // Predicated region
      $region13: #{tpu_custom_call.1} parent=5 // pred_check
        %p97 = pneg %p96
      $region14: #{tpu_custom_call.1} parent=5 // pred_check_branch
        %99 = sbr.rel (%p97) target = $region16
      $region15: #{tpu_custom_call.1} parent=5 // pred_region
        // Predicated region
        $region17: #{tpu_custom_call.1} parent=15 // pred_check
          %p100 = pneg %p47
        $region18: #{tpu_custom_call.1} parent=15 // pred_check_branch
          %102 = sbr.rel (%p100) target = $region20
        $region19: #{tpu_custom_call.1} parent=15 // pred_region
          %s103 = sand.u32 %s37, 1
          %s104 = scalar_lea.sflag [#allocation3], %s103
          %s105 = sand.u32 %s37, 1
          %s106 = smul.addr %s105, 8
          %s107 = scalar_lea.vmem [#allocation2], %s106
          %s108 = smul.u32 2, %s21
          %s110 = ssub.s32 128, 128
          %111 = vsyncadd %s104, %s110
          %s112 = smul.addr %s20, 2
          %s113 = sadd.s32 %s108, %s112
          %s114 = smul.addr %s113, 64
          %s115 = scalar_lea.hbm %s0, %s114
          %s117 = sshll.u32 %s107, 4
          %s118 = int_to_ptr.vmem [resolvable:$true] %s117
          %120 = dma.hbm_to_vmem [thread:$0]  %s115, 128, %s118, %s104
        $region20: #{tpu_custom_call.1} parent=15 // pred_fallthru
          _
      $region16: #{tpu_custom_call.1} parent=5 // pred_fallthru
        _
      %p121 = scmp.le.s32.totalorder 1, %s13
      %p122 = scmp.lt.s32.totalorder %s13, 3
      %p123 = pnand %p121, %p122
      %p124 = pneg %p123
      // Predicated region
      $region21: #{tpu_custom_call.1} parent=5 // pred_check
        _
      $region22: #{tpu_custom_call.1} parent=5 // pred_check_branch
        %126 = sbr.rel (%p123) target = $region24
      $region23: #{tpu_custom_call.1} parent=5 // pred_region
        %s127 = ssub.s32 %s13, 1
        %s128 = sand.u32 %s40, 1
        %s129 = scalar_lea.sflag [#allocation3], %s128
        %s130 = sand.u32 %s40, 1
        %s131 = smul.addr %s130, 8
        %s132 = scalar_lea.vmem [#allocation2], %s131
        // Predicated region
        $region25: #{tpu_custom_call.1} parent=23 // pred_check
          %p133 = pneg %p53
        $region26: #{tpu_custom_call.1} parent=23 // pred_check_branch
          %135 = sbr.rel (%p133) target = $region28
        $region27: #{tpu_custom_call.1} parent=23 // pred_region
          %136 = dma.done %s129, 128
        $region28: #{tpu_custom_call.1} parent=23 // pred_fallthru
          _
        %s137 = sand.u32 %s40, 1
        %s138 = scalar_lea.sflag [#allocation3], %s137
        %s139 = sand.u32 %s40, 1
        %s140 = smul.addr %s139, 8
        %s141 = scalar_lea.vmem [#allocation2], %s140
        %p142 = pneg %p53
        %p143 = pneg %p50
        %p144 = pneg %p81
        %p145 = pneg %p78
        %s146 = sand.u32 %s68, 1
        %s147 = scalar_lea.sflag [#allocation4], %s146
        %s148 = sand.u32 %s68, 1
        %s149 = smul.addr %s148, 8
        %s150 = scalar_lea.vmem [#allocation5], %s149
        %s151 = smul.u32 2, %s23
        %s152 = smul.u32 2, %s23
        %v153 = vld [vmem:[%s132] sm:$0xff]
        %v155 = vcombine.high %v153, %v153
        %vm157 = vcmask 1043456
        %v158 = vsel %vm157, %v153, 0.0
        %v159 = vrot.slane %v158, 4
        %v160 = vadd.f32 %v158, %v159
        %v161 = vrot.slane %v160, 2
        %v162 = vadd.f32 %v160, %v161
        %v163 = vrot.slane %v162, 1
        %v164 = vadd.f32 %v162, %v163
        %v165 = vsel %vm157, %v155, 0.0
        %v166 = vrot.slane %v165, 4
        %v167 = vadd.f32 %v165, %v166
        %v168 = vrot.slane %v167, 2
        %v169 = vadd.f32 %v167, %v168
        %v170 = vrot.slane %v169, 1
        %v171 = vadd.f32 %v169, %v170
        %v172 = vrcp.pop 4.0
        %v173 = vmul.f32 %v164, %v172
        %v174 = vmul.f32 %v171, %v172
        %v177 = vcombine.low %v173, %v174
        %v179 = vsub.f32 %v153, %v177
        %v180 = vmul.f32 %v179, %v179
        %v182 = vcombine.high %v180, %v180
        %v184 = vsel %vm157, %v180, 0.0
        %v185 = vrot.slane %v184, 4
        %v186 = vadd.f32 %v184, %v185
        %v187 = vrot.slane %v186, 2
        %v188 = vadd.f32 %v186, %v187
        %v189 = vrot.slane %v188, 1
        %v190 = vadd.f32 %v188, %v189
        %v191 = vsel %vm157, %v182, 0.0
        %v192 = vrot.slane %v191, 4
        %v193 = vadd.f32 %v191, %v192
        %v194 = vrot.slane %v193, 2
        %v195 = vadd.f32 %v193, %v194
        %v196 = vrot.slane %v195, 1
        %v197 = vadd.f32 %v195, %v196
        %v198 = vmul.f32 %v190, 0.33333334
        %v199 = vmul.f32 %v197, 0.33333334
        %v200 = vrsqrt.pop %v198
        %v201 = vrsqrt.pop %v199
        %v204 = vcombine.low %v200, %v201
        %v206 = vmul.f32 %v179, %v204
        %207 = vst [vmem:[%s150] sm:$0xff] %v206
        %s208 = sand.u32 %s68, 1
        %s209 = scalar_lea.sflag [#allocation4], %s208
        %s210 = sand.u32 %s68, 1
        %s211 = smul.addr %s210, 8
        %s212 = scalar_lea.vmem [#allocation5], %s211
        // Predicated region
        $region29: #{tpu_custom_call.1} parent=23 // pred_check
          %p213 = pneg %p78
        $region30: #{tpu_custom_call.1} parent=23 // pred_check_branch
          %215 = sbr.rel (%p213) target = $region32
        $region31: #{tpu_custom_call.1} parent=23 // pred_region
          %s216 = smul.u32 2, %s23
          %s218 = ssub.s32 128, 128
          %219 = vsyncadd %s209, %s218
          %s220 = smul.addr %s22, 2
          %s221 = sadd.s32 %s216, %s220
          %s222 = smul.addr %s221, 64
          %s223 = scalar_lea.hbm %s1, %s222
          %s225 = sshll.u32 %s212, 4
          %s226 = int_to_ptr.vmem [resolvable:$true] %s225
          %228 = dma.vmem_to_hbm [thread:$0]  %s226, 128, %s223, %s209
        $region32: #{tpu_custom_call.1} parent=23 // pred_fallthru
          _
      $region24: #{tpu_custom_call.1} parent=5 // pred_fallthru
        _
      %p229 = scmp.le.s32.totalorder 2, %s13
      // Predicated region
      $region33: #{tpu_custom_call.1} parent=5 // pred_check
        %p230 = pneg %p229
      $region34: #{tpu_custom_call.1} parent=5 // pred_check_branch
        %232 = sbr.rel (%p230) target = $region36
      $region35: #{tpu_custom_call.1} parent=5 // pred_region
        %s233 = ssub.s32 %s13, 2
        // Predicated region
        $region37: #{tpu_custom_call.1} parent=35 // pred_check
          %p234 = pneg %p84
        $region38: #{tpu_custom_call.1} parent=35 // pred_check_branch
          %236 = sbr.rel (%p234) target = $region40
        $region39: #{tpu_custom_call.1} parent=35 // pred_region
          %s237 = sand.u32 %s69, 1
          %s238 = scalar_lea.sflag [#allocation4], %s237
          %s239 = sand.u32 %s69, 1
          %s240 = smul.addr %s239, 8
          %s241 = scalar_lea.vmem [#allocation5], %s240
          %242 = dma.done %s238, 128
        $region40: #{tpu_custom_call.1} parent=35 // pred_fallthru
          _
      $region36: #{tpu_custom_call.1} parent=5 // pred_fallthru
        _
    $region6: #{tpu_custom_call.1} parent=1 // loop_footer
      %s17 = sadd.s32 1, %s13
    $region7: #{tpu_custom_call.1} parent=1 // loop_footer_branch
      %12 = sbr.rel target = $region3
    $region8: #{tpu_custom_call.1} parent=1 // loop_exit
      _
    %243 = vsyncpa [#allocation3], 1
    %s244 = scalar_lea.sflag [#allocation3], 1
    %245 = vsyncpa %s244, 1
    %246 = vsyncpa [#allocation4], 1
    %s247 = scalar_lea.sflag [#allocation4], 1
    %248 = vsyncpa %s247, 1

</llo_original>
